<compile_context>
chip_gen: v7x
topology: tpu7x:2x2x1
jax: 0.10.0
libtpu: 0.0.40
codegen_flags: <defaults>
</compile_context>

<pallas_src>
import numpy as np
import jax
import jax.numpy as jnp
from jax import lax
from jax.experimental import pallas as pl
from jax.experimental.pallas import tpu as pltpu

# ---- OUInhibitionProcess default parameters (deterministic, from __init__) ----
DT = 0.001
LOG_DT = float(np.log(DT))
INH_INCREASE = 3000.0
INH_REST = 500.0
INH_TAU = 0.005
NOISE_REST = 1000.0
NOISE_TAU = 0.005
NOISE_SIGMA = 50.0
INH_DECAY = float(np.exp(-DT / INH_TAU))
NOISE_DECAY = float(np.exp(-DT / NOISE_TAU))
TOTAL_NOISE_SIGMA = float(NOISE_SIGMA * np.sqrt((1.0 - NOISE_DECAY ** 2) / 2.0 * NOISE_TAU))

# NOTE: SpikeRateTracker is constructed with collect_rates=False by default, so
# rate_tracker.update(...) is a no-op and has no effect on the outputs.


def _default_bf16_exp():
    """bf16 EUP exists on v6e / v7x only; be conservative elsewhere."""
    try:
        kind = jax.devices()[0].device_kind.lower()
    except Exception:
        return False
    return ("v6" in kind) or ("v7" in kind)


def _make_kernel(bf16_exp):
    def kernel(tri_ref, x_ref, rand_ref, spikes_ref, inh_noise_ref):
        x = x_ref[...].astype(jnp.float32)            # internal math always f32
        tb, n = x.shape
        rand = rand_ref[...]                          # (TB, 4) f32

        # Static lane slices of the packed randoms (no XLU reductions).
        n0 = rand[:, 0:1]   # torch.normal in the state-init inhibition step
        ru = rand[:, 1:2]   # torch.rand for spike_occurred
        rm = rand[:, 2:3]   # torch.rand inside efficient_multinomial
        n1 = rand[:, 3:4]   # torch.normal in the final inhibition step

        # ---- initial inhibition state (inhibition_state is None in forward) ----
        # step(zeros, state=None):
        #   inhibition = rest + (0 - rest)*decay + 0      = rest*(1-decay)
        #   noise      = rest + 0*decay + sigma*N(0,1)    = rest + sigma*N(0,1)
        inh0 = jnp.full((tb, 1), INH_REST * (1.0 - INH_DECAY), dtype=jnp.float32)
        noise0 = NOISE_REST + TOTAL_NOISE_SIGMA * n0                  # (TB, 1)

        # ---- rate calc (single logsumexp; the second one is a per-row shift) ----
        m_x = jnp.max(x, axis=-1, keepdims=True)
        lse_x = m_x + jnp.log(jnp.sum(jnp.exp(x - m_x), axis=-1, keepdims=True))
        z = (x - lse_x) * (1.0 / 50.0)
        if bf16_exp:
            rel_rates = jnp.exp(z.astype(jnp.bfloat16))               # bf16 EUP
        else:
            rel_rates = jnp.exp(z).astype(jnp.bfloat16)               # f32 EUP (v5e)
        # logsumexp(x - inh0 + noise0) == lse_x - inh0 + noise0 (per-row shift).
        log_total_rate = lse_x - inh0 + noise0                        # (TB, 1)

        # ---- spike generation ----
        # ru == 0 -> log = -inf -> always fires (matches torch.rand semantics).
        spike_occurred = jnp.log(ru) < (log_total_rate + LOG_DT)      # (TB,1) bool

        # efficient_multinomial: first lane where the UNNORMALIZED cumulative
        # sum reaches the uniform draw (argmax of all-zero byte row -> 0).
        # Cumsum along lanes via matmul against the resident lower-triangular
        # matrix on the MXU (bf16 inputs, f32 accumulation).
        cum = jnp.dot(rel_rates, tri_ref[...],
                      preferred_element_type=jnp.float32)             # (TB, N)
        # cum is monotone non-decreasing along lanes (rel_rates >= 0), so
        # count(cum < rm) == index of first lane with cum >= rm, or n if none.
        first_true = jnp.sum((cum < rm).astype(jnp.int32), axis=-1, keepdims=True)
        spike_loc = jnp.where(first_true == n, 0, first_true)         # (TB, 1)

        lane = lax.broadcasted_iota(jnp.int32, (1, n), 1)             # (1, N)
        spikes_ref[...] = ((lane == spike_loc) & spike_occurred).astype(spikes_ref.dtype)

        # ---- inhibition_process.step(spike_occurred, (inh0, noise0)) ----
        spike_f = spike_occurred.astype(jnp.float32)                  # (TB, 1)
        inh = INH_REST + (inh0 - INH_REST) * INH_DECAY + spike_f * INH_INCREASE
        noise = (NOISE_REST + (noise0 - NOISE_REST) * NOISE_DECAY
                 + TOTAL_NOISE_SIGMA * n1)
        lane2 = lax.broadcasted_iota(jnp.int32, (1, 2), 1)
        inh_noise_ref[...] = jnp.where(lane2 == 0, inh, noise).astype(inh_noise_ref.dtype)

    return kernel


def stochastic_output_neuron_cell(x, key, tile_b=1024, bf16_exp=None):
    """Forward pass of StochasticOutputNeuronCell with inhibition_state=None.

    Returns (out_spikes, (inhibition, noise)), matching the PyTorch module.
    tile_b is the batch tile (sweep 512-2048 for large B); it is clamped to B
    and halved if needed so the grid has >=2 steps (v7x dual-TC sharding).
    Internal math runs in f32 regardless of x.dtype; outputs are cast to x.dtype.
    """
    B, N = x.shape
    if bf16_exp is None:
        bf16_exp = _default_bf16_exp()

    tile_b = min(tile_b, B)
    # Keep >= 2 grid steps when possible so "parallel" batch sharding can use
    # both v7x TensorCores (costs nothing on single-TC v5e/v6e).
    if B // tile_b < 2 and B % 2 == 0 and (B // 2) % 8 == 0:
        tile_b = B // 2
    assert B % tile_b == 0, "batch must be divisible by the batch tile"
    assert tile_b % 8 == 0 or tile_b == B, "tile_b must be a multiple of 8 (or == B)"

    k0, k1, k2, k3 = jax.random.split(key, 4)
    # Random draws torch produces internally, packed into one (B, 4) f32 array:
    #   col 0: normal  (state-init noise)        col 1: uniform (spike_occurred)
    #   col 2: uniform (efficient_multinomial)   col 3: normal  (final noise step)
    rand = jnp.concatenate([
        jax.random.normal(k0, (B, 1), dtype=jnp.float32),
        jax.random.uniform(k1, (B, 1), dtype=jnp.float32),
        jax.random.uniform(k2, (B, 1), dtype=jnp.float32),
        jax.random.normal(k3, (B, 1), dtype=jnp.float32),
    ], axis=-1)

    # Lower-triangular (cumsum) matrix, built once, resident across the grid.
    # bf16 is exact for 0/1 and halves its DMA/VMEM footprint (32 KiB at N=128).
    # TODO(synk): chunked cumsum if N grows past ~2K (tri VMEM / MXU FLOPs blow up).
    row = lax.broadcasted_iota(jnp.int32, (N, N), 0)
    col = lax.broadcasted_iota(jnp.int32, (N, N), 1)
    tri = (row <= col).astype(jnp.bfloat16)                           # (N, N)

    out_shapes = (
        jax.ShapeDtypeStruct((B, N), x.dtype),   # out_spikes (exact 0/1)
        jax.ShapeDtypeStruct((B, 2), x.dtype),   # packed (inhibition, noise)
    )

    spikes, inh_noise = pl.pallas_call(
        _make_kernel(bf16_exp),
        out_shape=out_shapes,
        grid=(B // tile_b,),
        in_specs=[
            pl.BlockSpec((N, N), lambda i: (0, 0)),        # tri (resident)
            pl.BlockSpec((tile_b, N), lambda i: (i, 0)),   # x
            pl.BlockSpec((tile_b, 4), lambda i: (i, 0)),   # packed randoms
        ],
        out_specs=(
            pl.BlockSpec((tile_b, N), lambda i: (i, 0)),   # spikes (lane-dense)
            pl.BlockSpec((tile_b, 2), lambda i: (i, 0)),   # packed (inh, noise)
        ),
        compiler_params=pltpu.CompilerParams(dimension_semantics=("parallel",)),
    )(tri, x, rand)

    inhibition = inh_noise[:, 0:1]
    noise = inh_noise[:, 1:2]
    return spikes, (inhibition, noise)


if __name__ == "__main__":
    key = jax.random.PRNGKey(0)
    kx, kr = jax.random.split(key)

    B, N = 64, 128  # batch, number of output neurons (small test shape)
    x = jax.random.normal(kx, (B, N), dtype=jnp.float32) * 2.0 + 1.0

    out_spikes, (inhibition, noise) = stochastic_output_neuron_cell(x, kr)
    jax.block_until_ready((out_spikes, inhibition, noise))

    # sanity: each row is either all-zero or a one-hot spike
    row_sums = jnp.sum(out_spikes, axis=-1)
    assert out_spikes.shape == (B, N)
    assert inhibition.shape == (B, 1) and noise.shape == (B, 1)
    assert bool(jnp.all((row_sums == 0.0) | (row_sums == 1.0)))
    assert bool(jnp.all(jnp.isfinite(inhibition))) and bool(jnp.all(jnp.isfinite(noise)))

    print("KERNEL_OK")
</pallas_src>

<mosaic_0001>
module attributes {stable_mosaic.version = 11 : i64} {
  func.func @kernel(%arg0: i32, %arg1: memref<128x128xbf16, #tpu.memory_space<vmem>>, %arg2: memref<32x128xf32, #tpu.memory_space<vmem>>, %arg3: memref<32x4xf32, #tpu.memory_space<vmem>>, %arg4: memref<32x128xf32, #tpu.memory_space<vmem>>, %arg5: memref<32x2xf32, #tpu.memory_space<vmem>>) attributes {dimension_semantics = [#tpu.dimension_semantics<parallel>], iteration_bounds = array<i64: 2>, scalar_prefetch = 0 : i64, scratch_operands = 0 : i64, tpu.core_type = #tpu.core_type<tc>, window_params = [{pipeline_mode = #tpu.pipeline_mode<synchronous>, transform_indices = @transform_0, window_bounds = array<i64: 128, 128>}, {transform_indices = @transform_1, window_bounds = array<i64: 32, 128>}, {transform_indices = @transform_2, window_bounds = array<i64: 32, 4>}, {transform_indices = @transform_3, window_bounds = array<i64: 32, 128>}, {transform_indices = @transform_4, window_bounds = array<i64: 32, 2>}]} {
    %c0 = arith.constant 0 : index
    %c0_0 = arith.constant 0 : index
    %0 = vector.load %arg2[%c0, %c0_0] : memref<32x128xf32, #tpu.memory_space<vmem>>, vector<32x128xf32>
    %c0_1 = arith.constant 0 : index
    %c0_2 = arith.constant 0 : index
    %1 = vector.load %arg3[%c0_1, %c0_2] : memref<32x4xf32, #tpu.memory_space<vmem>>, vector<32x4xf32>
    %2 = vector.extract_strided_slice %1 {offsets = [0, 0], sizes = [32, 1], strides = [1, 1]} : vector<32x4xf32> to vector<32x1xf32>
    %3 = vector.extract_strided_slice %1 {offsets = [0, 1], sizes = [32, 1], strides = [1, 1]} : vector<32x4xf32> to vector<32x1xf32>
    %4 = vector.extract_strided_slice %1 {offsets = [0, 2], sizes = [32, 1], strides = [1, 1]} : vector<32x4xf32> to vector<32x1xf32>
    %5 = vector.extract_strided_slice %1 {offsets = [0, 3], sizes = [32, 1], strides = [1, 1]} : vector<32x4xf32> to vector<32x1xf32>
    %cst = arith.constant 90.6346207 : f32
    %6 = vector.broadcast %cst : f32 to vector<32x1xf32>
    %cst_3 = arith.constant 1.43544412 : f32
    %7 = vector.broadcast %cst_3 : f32 to vector<32x1xf32>
    %8 = arith.mulf %7, %2 : vector<32x1xf32>
    %cst_4 = arith.constant 1.000000e+03 : f32
    %9 = vector.broadcast %cst_4 : f32 to vector<32x1xf32>
    %10 = arith.addf %9, %8 : vector<32x1xf32>
    %cst_5 = arith.constant dense<0xFF800000> : vector<32xf32>
    %11 = vector.multi_reduction <maximumf>, %0, %cst_5 [1] : vector<32x128xf32> to vector<32xf32>
    %12 = vector.shape_cast %11 : vector<32xf32> to vector<32x1xf32>
    %13 = vector.broadcast %12 : vector<32x1xf32> to vector<32x128xf32>
    %14 = arith.subf %0, %13 : vector<32x128xf32>
    %15 = math.exp %14 : vector<32x128xf32>
    %cst_6 = arith.constant dense<0.000000e+00> : vector<32xf32>
    %16 = vector.multi_reduction <add>, %15, %cst_6 [1] : vector<32x128xf32> to vector<32xf32>
    %17 = vector.shape_cast %16 : vector<32xf32> to vector<32x1xf32>
    %18 = math.log %17 : vector<32x1xf32>
    %19 = arith.addf %12, %18 : vector<32x1xf32>
    %20 = vector.broadcast %19 : vector<32x1xf32> to vector<32x128xf32>
    %21 = arith.subf %0, %20 : vector<32x128xf32>
    %cst_7 = arith.constant 2.000000e-02 : f32
    %22 = vector.broadcast %cst_7 : f32 to vector<32x128xf32>
    %23 = arith.mulf %21, %22 : vector<32x128xf32>
    %24 = math.exp %23 : vector<32x128xf32>
    %25 = arith.truncf %24 : vector<32x128xf32> to vector<32x128xbf16>
    %26 = arith.subf %19, %6 : vector<32x1xf32>
    %27 = arith.addf %26, %10 : vector<32x1xf32>
    %28 = math.log %3 : vector<32x1xf32>
    %cst_8 = arith.constant -6.90775537 : f32
    %29 = vector.broadcast %cst_8 : f32 to vector<32x1xf32>
    %30 = arith.addf %27, %29 : vector<32x1xf32>
    %31 = arith.cmpf olt, %28, %30 : vector<32x1xf32>
    %c0_9 = arith.constant 0 : index
    %c0_10 = arith.constant 0 : index
    %32 = vector.load %arg1[%c0_9, %c0_10] : memref<128x128xbf16, #tpu.memory_space<vmem>>, vector<128x128xbf16>
    %cst_11 = arith.constant dense<0.000000e+00> : vector<32x128xf32>
    %33 = tpu.matmul %25, %32, %cst_11 {dimension_numbers = #tpu.dot_dimension_numbers<[1], [0], [0], [1], [0, 0, 1, 1], [], []>} : vector<32x128xbf16>, vector<128x128xbf16>, vector<32x128xf32> -> vector<32x128xf32>
    %34 = vector.broadcast %4 : vector<32x1xf32> to vector<32x128xf32>
    %35 = arith.cmpf olt, %33, %34 : vector<32x128xf32>
    %36 = arith.extui %35 : vector<32x128xi1> to vector<32x128xi32>
    %cst_12 = arith.constant dense<0> : vector<32xi32>
    %37 = vector.multi_reduction <add>, %36, %cst_12 [1] : vector<32x128xi32> to vector<32xi32>
    %38 = vector.shape_cast %37 : vector<32xi32> to vector<32x1xi32>
    %c128_i32 = arith.constant 128 : i32
    %39 = vector.broadcast %c128_i32 : i32 to vector<32x1xi32>
    %40 = arith.cmpi eq, %38, %39 : vector<32x1xi32>
    %c0_i32 = arith.constant 0 : i32
    %41 = vector.broadcast %c0_i32 : i32 to vector<32x1xi32>
    %42 = arith.select %40, %41, %38 : vector<32x1xi1>, vector<32x1xi32>
    %43 = tpu.iota {dimensions = array<i32: 1>} : vector<1x128xi32>
    %44 = vector.broadcast %43 : vector<1x128xi32> to vector<32x128xi32>
    %45 = vector.broadcast %42 : vector<32x1xi32> to vector<32x128xi32>
    %46 = arith.cmpi eq, %44, %45 : vector<32x128xi32>
    %47 = vector.broadcast %31 : vector<32x1xi1> to vector<32x128xi1>
    %48 = arith.andi %46, %47 : vector<32x128xi1>
    %49 = arith.extui %48 : vector<32x128xi1> to vector<32x128xi32>
    %50 = arith.sitofp %49 : vector<32x128xi32> to vector<32x128xf32>
    %c0_13 = arith.constant 0 : index
    %c0_14 = arith.constant 0 : index
    %51 = vector.load %arg4[%c0_13, %c0_14] : memref<32x128xf32, #tpu.memory_space<vmem>>, vector<32x128xf32>
    tpu.vector_store %arg4[%c0_13, %c0_14], %50 {strides = array<i32>} : memref<32x128xf32, #tpu.memory_space<vmem>>, vector<32x128xf32>,
    %52 = arith.extui %31 : vector<32x1xi1> to vector<32x1xi32>
    %53 = arith.sitofp %52 : vector<32x1xi32> to vector<32x1xf32>
    %cst_15 = arith.constant 5.000000e+02 : f32
    %54 = vector.broadcast %cst_15 : f32 to vector<32x1xf32>
    %55 = arith.subf %6, %54 : vector<32x1xf32>
    %cst_16 = arith.constant 0.818730771 : f32
    %56 = vector.broadcast %cst_16 : f32 to vector<32x1xf32>
    %57 = arith.mulf %55, %56 : vector<32x1xf32>
    %cst_17 = arith.constant 5.000000e+02 : f32
    %58 = vector.broadcast %cst_17 : f32 to vector<32x1xf32>
    %59 = arith.addf %58, %57 : vector<32x1xf32>
    %cst_18 = arith.constant 3.000000e+03 : f32
    %60 = vector.broadcast %cst_18 : f32 to vector<32x1xf32>
    %61 = arith.mulf %53, %60 : vector<32x1xf32>
    %62 = arith.addf %59, %61 : vector<32x1xf32>
    %cst_19 = arith.constant 1.000000e+03 : f32
    %63 = vector.broadcast %cst_19 : f32 to vector<32x1xf32>
    %64 = arith.subf %10, %63 : vector<32x1xf32>
    %cst_20 = arith.constant 0.818730771 : f32
    %65 = vector.broadcast %cst_20 : f32 to vector<32x1xf32>
    %66 = arith.mulf %64, %65 : vector<32x1xf32>
    %cst_21 = arith.constant 1.000000e+03 : f32
    %67 = vector.broadcast %cst_21 : f32 to vector<32x1xf32>
    %68 = arith.addf %67, %66 : vector<32x1xf32>
    %cst_22 = arith.constant 1.43544412 : f32
    %69 = vector.broadcast %cst_22 : f32 to vector<32x1xf32>
    %70 = arith.mulf %69, %5 : vector<32x1xf32>
    %71 = arith.addf %68, %70 : vector<32x1xf32>
    %72 = tpu.iota {dimensions = array<i32: 1>} : vector<1x2xi32>
    %c0_i32_23 = arith.constant 0 : i32
    %73 = vector.broadcast %c0_i32_23 : i32 to vector<1x2xi32>
    %74 = arith.cmpi eq, %72, %73 : vector<1x2xi32>
    %75 = vector.shape_cast %74 : vector<1x2xi1> to vector<1x2xi1>
    %76 = vector.broadcast %75 : vector<1x2xi1> to vector<32x2xi1>
    %77 = vector.shape_cast %62 : vector<32x1xf32> to vector<32x1xf32>
    %78 = vector.broadcast %77 : vector<32x1xf32> to vector<32x2xf32>
    %79 = vector.shape_cast %71 : vector<32x1xf32> to vector<32x1xf32>
    %80 = vector.broadcast %79 : vector<32x1xf32> to vector<32x2xf32>
    %81 = arith.select %76, %78, %80 : vector<32x2xi1>, vector<32x2xf32>
    %c0_24 = arith.constant 0 : index
    %c0_25 = arith.constant 0 : index
    %82 = vector.load %arg5[%c0_24, %c0_25] : memref<32x2xf32, #tpu.memory_space<vmem>>, vector<32x2xf32>
    tpu.vector_store %arg5[%c0_24, %c0_25], %81 {strides = array<i32>} : memref<32x2xf32, #tpu.memory_space<vmem>>, vector<32x2xf32>,
    return
  }
  func.func @transform_0(%arg0: i32) -> (i32, i32) {
    %c0_i32 = arith.constant 0 : i32
    %c0_i32_0 = arith.constant 0 : i32
    %c0_i32_1 = arith.constant 0 : i32
    return %c0_i32, %c0_i32_0 : i32, i32
  }
  func.func @transform_1(%arg0: i32) -> (i32, i32) {
    %c0_i32 = arith.constant 0 : i32
    %c0_i32_0 = arith.constant 0 : i32
    return %arg0, %c0_i32 : i32, i32
  }
  func.func @transform_2(%arg0: i32) -> (i32, i32) {
    %c0_i32 = arith.constant 0 : i32
    %c0_i32_0 = arith.constant 0 : i32
    return %arg0, %c0_i32 : i32, i32
  }
  func.func @transform_3(%arg0: i32) -> (i32, i32) {
    %c0_i32 = arith.constant 0 : i32
    %c0_i32_0 = arith.constant 0 : i32
    return %arg0, %c0_i32 : i32, i32
  }
  func.func @transform_4(%arg0: i32) -> (i32, i32) {
    %c0_i32 = arith.constant 0 : i32
    %c0_i32_0 = arith.constant 0 : i32
    return %arg0, %c0_i32 : i32, i32
  }
}

</mosaic_0001>

<llo_original>
// kernel: tpu_custom_call.1
$region0: #{tpu_custom_call.1}
  #allocation0 [shape = 'u32[]', space=smem, size = 0x4, offset = 0x4, fixed_abs, tag = 'smem constant byte address 0x4 - core index']
  #allocation1 [shape = 'u32[144,128]{1,0:T(1,128)}', space=vmem, size = 0x12000, scoped, tag = 'internal scratch']
  %s0 = inlined_call_operand.vmem [shape: bf16[128,128], index: 0, kind: input, shape index: {}]
  %s1 = inlined_call_operand.hbm [shape: f32[64,128], index: 1, kind: input, shape index: {}]
  %s2 = inlined_call_operand.vmem [shape: f32[64,4], index: 2, kind: input, shape index: {}]
  %s3 = inlined_call_operand.hbm [shape: f32[64,128], index: 3, kind: output, shape index: {0}]
  %s4 = inlined_call_operand.vmem [shape: f32[64,2], index: 4, kind: output, shape index: {1}]
  %5 = xla_tuple %s3, %s4
  %s6 = sld [smem:[#allocation0]]
  $region57: #{tpu_custom_call.1} parent=0
    _
  %s8 = ssub.s32 1, %s6
  %s9 = scalar_select 0, %s8, %s6
  $region1: #{tpu_custom_call.1} parent=0
    #allocation2 [shape = 'u8[32768]{0}', space=vmem, size = 0x8000, scoped, tag = 'input window, operand 1']
    #allocation3 [shape = 's32[2]{0}', space=sflag, size = 0x8, scoped, tag = 'scoped memory for tpu_custom_call.1']
    #allocation4 [shape = 's32[2]{0}', space=sflag, size = 0x8, scoped, tag = 'scoped memory for tpu_custom_call.1']
    #allocation5 [shape = 'u8[32768]{0}', space=vmem, size = 0x8000, scoped, tag = 'output window, operand 0']
    %10 = vsyncpa [#allocation3], 0
    %s11 = scalar_lea.sflag [#allocation3], 1
    %12 = vsyncpa %s11, 0
    %13 = vsyncpa [#allocation4], 0
    %s14 = scalar_lea.sflag [#allocation4], 1
    %15 = vsyncpa %s14, 0
    loop: start=0, step=1, limit=4
    $region2: #{tpu_custom_call.1} parent=1 // loop_pre_header
      _
    $region3: #{tpu_custom_call.1} parent=1 // loop_header
      %s17 = sphi 0, %s21
      %p18 = scmp.ge.s32.totalorder %s17, 4
      %s25 = sphi 0, %s25
      %s27 = sphi 0, %s25
      %s28 = sphi 0, %s27
      %s42 = sphi 0, %s28
      %s48 = sphi 0, %s50
      %s51 = sphi 0, %s48
      %s52 = sphi 0, %s51
      %s68 = sphi 0, %s52
      %s74 = sphi 0, %s76
      %s77 = sphi 0, %s74
      %s78 = sphi 0, %s77
      %s94 = sphi 0, %s78
      %s100 = sphi 0, %s102
      %s103 = sphi 0, %s100
      %s104 = sphi 0, %s103
      %s120 = sphi 0, %s104
      %s126 = sphi 0, %s128
      %s129 = sphi 0, %s126
      %s130 = sphi 0, %s129
      %s146 = sphi 0, %s130
    $region4: #{tpu_custom_call.1} parent=1 // loop_header_branch
      %20 = sbr.rel (%p18) target = $region8
    $region5: #{tpu_custom_call.1} parent=1 // loop_body
      %s22 = ssub.s32 %s17, 1
      %s23 = ssub.s32 %s17, 2
      %s24 = sadd.s32 %s17, 1
      %s26 = sadd.s32 %s25, 1
      %p29 = scmp.eq.s32.totalorder %s17, 1
      %p30 = scmp.ne.s32.totalorder %s25, %s27
      %p31 = scmp.eq.s32.totalorder %s17, 0
      %p32 = por %p30, %p31
      %p33 = scmp.ne.s32.totalorder %s25, %s27
      %p34 = scmp.eq.s32.totalorder %s22, 1
      %p35 = por %p33, %p34
      %p36 = scmp.ne.s32.totalorder %s27, %s28
      %p37 = scmp.eq.s32.totalorder %s22, 0
      %p38 = por %p36, %p37
      %p39 = scmp.ne.s32.totalorder %s27, %s28
      %p40 = scmp.eq.s32.totalorder %s23, 1
      %p41 = por %p39, %p40
      %p43 = scmp.ne.s32.totalorder %s28, %s42
      %p44 = scmp.eq.s32.totalorder %s23, 0
      %p45 = por %p43, %p44
      %s46 = ssub.s32 %s17, %s24
      %p47 = scmp.eq.s32.totalorder %s46, 0
      %s49 = sadd.s32 %s48, 1
      %s50 = scalar_select %p47, %s48, %s49
      %p53 = pneg %p47
      %p54 = scmp.eq.s32.totalorder %s17, 1
      %p55 = por %p53, %p54
      %p56 = scmp.ne.s32.totalorder %s48, %s51
      %p57 = scmp.eq.s32.totalorder %s17, 0
      %p58 = por %p56, %p57
      %p59 = scmp.ne.s32.totalorder %s48, %s51
      %p60 = scmp.eq.s32.totalorder %s22, 1
      %p61 = por %p59, %p60
      %p62 = scmp.ne.s32.totalorder %s51, %s52
      %p63 = scmp.eq.s32.totalorder %s22, 0
      %p64 = por %p62, %p63
      %p65 = scmp.ne.s32.totalorder %s51, %s52
      %p66 = scmp.eq.s32.totalorder %s23, 1
      %p67 = por %p65, %p66
      %p69 = scmp.ne.s32.totalorder %s52, %s68
      %p70 = scmp.eq.s32.totalorder %s23, 0
      %p71 = por %p69, %p70
      %s72 = ssub.s32 %s17, %s24
      %p73 = scmp.eq.s32.totalorder %s72, 0
      %s75 = sadd.s32 %s74, 1
      %s76 = scalar_select %p73, %s74, %s75
      %p79 = pneg %p73
      %p80 = scmp.eq.s32.totalorder %s17, 1
      %p81 = por %p79, %p80
      %p82 = scmp.ne.s32.totalorder %s74, %s77
      %p83 = scmp.eq.s32.totalorder %s17, 0
      %p84 = por %p82, %p83
      %p85 = scmp.ne.s32.totalorder %s74, %s77
      %p86 = scmp.eq.s32.totalorder %s22, 1
      %p87 = por %p85, %p86
      %p88 = scmp.ne.s32.totalorder %s77, %s78
      %p89 = scmp.eq.s32.totalorder %s22, 0
      %p90 = por %p88, %p89
      %p91 = scmp.ne.s32.totalorder %s77, %s78
      %p92 = scmp.eq.s32.totalorder %s23, 1
      %p93 = por %p91, %p92
      %p95 = scmp.ne.s32.totalorder %s78, %s94
      %p96 = scmp.eq.s32.totalorder %s23, 0
      %p97 = por %p95, %p96
      %s98 = ssub.s32 %s17, %s24
      %p99 = scmp.eq.s32.totalorder %s98, 0
      %s101 = sadd.s32 %s100, 1
      %s102 = scalar_select %p99, %s100, %s101
      %p105 = pneg %p99
      %p106 = scmp.eq.s32.totalorder %s17, 1
      %p107 = por %p105, %p106
      %p108 = scmp.ne.s32.totalorder %s100, %s103
      %p109 = scmp.eq.s32.totalorder %s17, 0
      %p110 = por %p108, %p109
      %p111 = scmp.ne.s32.totalorder %s100, %s103
      %p112 = scmp.eq.s32.totalorder %s22, 1
      %p113 = por %p111, %p112
      %p114 = scmp.ne.s32.totalorder %s103, %s104
      %p115 = scmp.eq.s32.totalorder %s22, 0
      %p116 = por %p114, %p115
      %p117 = scmp.ne.s32.totalorder %s103, %s104
      %p118 = scmp.eq.s32.totalorder %s23, 1
      %p119 = por %p117, %p118
      %p121 = scmp.ne.s32.totalorder %s104, %s120
      %p122 = scmp.eq.s32.totalorder %s23, 0
      %p123 = por %p121, %p122
      %s124 = ssub.s32 %s17, %s24
      %p125 = scmp.eq.s32.totalorder %s124, 0
      %s127 = sadd.s32 %s126, 1
      %s128 = scalar_select %p125, %s126, %s127
      %p131 = pneg %p125
      %p132 = scmp.eq.s32.totalorder %s17, 1
      %p133 = por %p131, %p132
      %p134 = scmp.ne.s32.totalorder %s126, %s129
      %p135 = scmp.eq.s32.totalorder %s17, 0
      %p136 = por %p134, %p135
      %p137 = scmp.ne.s32.totalorder %s126, %s129
      %p138 = scmp.eq.s32.totalorder %s22, 1
      %p139 = por %p137, %p138
      %p140 = scmp.ne.s32.totalorder %s129, %s130
      %p141 = scmp.eq.s32.totalorder %s22, 0
      %p142 = por %p140, %p141
      %p143 = scmp.ne.s32.totalorder %s129, %s130
      %p144 = scmp.eq.s32.totalorder %s23, 1
      %p145 = por %p143, %p144
      %p147 = scmp.ne.s32.totalorder %s130, %s146
      %p148 = scmp.eq.s32.totalorder %s23, 0
      %p149 = por %p147, %p148
      %p150 = scmp.le.s32.totalorder 1, %s17
      %p151 = scmp.lt.s32.totalorder %s17, 3
      %p152 = pnand %p150, %p151
      %p153 = pneg %p152
      // Predicated region
      $region9: #{tpu_custom_call.1} parent=5 // pred_check
        _
      $region10: #{tpu_custom_call.1} parent=5 // pred_check_branch
        %155 = sbr.rel (%p152) target = $region12
      $region11: #{tpu_custom_call.1} parent=5 // pred_region
        %s156 = ssub.s32 %s17, 1
        // Predicated region
        $region13: #{tpu_custom_call.1} parent=11 // pred_check
          %p157 = pneg %p38
        $region14: #{tpu_custom_call.1} parent=11 // pred_check_branch
          %159 = sbr.rel (%p157) target = $region16
        $region15: #{tpu_custom_call.1} parent=11 // pred_region
          _
        $region16: #{tpu_custom_call.1} parent=11 // pred_fallthru
          _
      $region12: #{tpu_custom_call.1} parent=5 // pred_fallthru
        _
      %p160 = scmp.lt.s32.totalorder %s17, 2
      // Predicated region
      $region17: #{tpu_custom_call.1} parent=5 // pred_check
        %p161 = pneg %p160
      $region18: #{tpu_custom_call.1} parent=5 // pred_check_branch
        %163 = sbr.rel (%p161) target = $region20
      $region19: #{tpu_custom_call.1} parent=5 // pred_region
        // Predicated region
        $region21: #{tpu_custom_call.1} parent=19 // pred_check
          %p164 = pneg %p58
        $region22: #{tpu_custom_call.1} parent=19 // pred_check_branch
          %166 = sbr.rel (%p164) target = $region24
        $region23: #{tpu_custom_call.1} parent=19 // pred_region
          %s167 = sand.u32 %s48, 1
          %s168 = scalar_lea.sflag [#allocation3], %s167
          %s169 = sand.u32 %s48, 1
          %s170 = smul.addr %s169, 32
          %s171 = scalar_lea.vmem [#allocation2], %s170
          %s172 = smul.u32 4, %s17
          %s174 = ssub.s32 512, 512
          %175 = vsyncadd %s168, %s174
          %s176 = smul.addr %s172, 128
          %s177 = scalar_lea.hbm %s1, %s176
          %s178 = sshll.u32 %s171, 4
          %s179 = int_to_ptr.vmem [resolvable:$true] %s178
          %184 = dma.hbm_to_vmem [thread:$0]  %s177, 512, %s179, %s168, 128, 128, 8
        $region24: #{tpu_custom_call.1} parent=19 // pred_fallthru
          _
        // Predicated region
        $region25: #{tpu_custom_call.1} parent=19 // pred_check
          %p185 = pneg %p84
        $region26: #{tpu_custom_call.1} parent=19 // pred_check_branch
          %187 = sbr.rel (%p185) target = $region28
        $region27: #{tpu_custom_call.1} parent=19 // pred_region
          %s188 = smul.u32 4, %s17
          %p189 = scmp.lt.s32.totalorder %s188, 7
          %s190 = scalar_select %p189, %s188, 7
          %s191 = smul.addr %s190, 8
          %s192 = scalar_lea.vmem %s2, %s191
          %s193 = smul.u32 4, %s17
        $region28: #{tpu_custom_call.1} parent=19 // pred_fallthru
          _
      $region20: #{tpu_custom_call.1} parent=5 // pred_fallthru
        _
      %p194 = scmp.le.s32.totalorder 1, %s17
      %p195 = scmp.lt.s32.totalorder %s17, 3
      %p196 = pnand %p194, %p195
      %p197 = pneg %p196
      // Predicated region
      $region29: #{tpu_custom_call.1} parent=5 // pred_check
        _
      $region30: #{tpu_custom_call.1} parent=5 // pred_check_branch
        %199 = sbr.rel (%p196) target = $region32
      $region31: #{tpu_custom_call.1} parent=5 // pred_region
        %s200 = ssub.s32 %s17, 1
        %s201 = sand.u32 %s51, 1
        %s202 = scalar_lea.sflag [#allocation3], %s201
        %s203 = sand.u32 %s51, 1
        %s204 = smul.addr %s203, 32
        %s205 = scalar_lea.vmem [#allocation2], %s204
        // Predicated region
        $region33: #{tpu_custom_call.1} parent=31 // pred_check
          %p206 = pneg %p64
        $region34: #{tpu_custom_call.1} parent=31 // pred_check_branch
          %208 = sbr.rel (%p206) target = $region36
        $region35: #{tpu_custom_call.1} parent=31 // pred_region
          %209 = dma.done %s202, 512
        $region36: #{tpu_custom_call.1} parent=31 // pred_fallthru
          _
        %p210 = pneg %p38
        %p211 = pneg %p35
        %s212 = sand.u32 %s51, 1
        %s213 = scalar_lea.sflag [#allocation3], %s212
        %s214 = sand.u32 %s51, 1
        %s215 = smul.addr %s214, 32
        %s216 = scalar_lea.vmem [#allocation2], %s215
        %p217 = pneg %p64
        %p218 = pneg %p61
        %s219 = smul.u32 4, %s22
        %p220 = scmp.lt.s32.totalorder %s219, 7
        %s221 = scalar_select %p220, %s219, 7
        %s222 = smul.addr %s221, 8
        %s223 = scalar_lea.vmem %s2, %s222
        %p224 = pneg %p90
        %p225 = pneg %p87
        %p226 = pneg %p116
        %p227 = pneg %p113
        %s228 = sand.u32 %s103, 1
        %s229 = scalar_lea.sflag [#allocation4], %s228
        %s230 = sand.u32 %s103, 1
        %s231 = smul.addr %s230, 32
        %s232 = scalar_lea.vmem [#allocation5], %s231
        %p233 = pneg %p142
        %p234 = pneg %p139
        %s235 = smul.u32 4, %s22
        %p236 = scmp.lt.s32.totalorder %s235, 7
        %s237 = scalar_select %p236, %s235, 7
        %s238 = smul.addr %s237, 8
        %s239 = scalar_lea.vmem %s4, %s238
        %s240 = smul.u32 4, %s22
        %s241 = smul.u32 4, %s22
        %p242 = scmp.lt.s32.totalorder %s241, 7
        %s243 = scalar_select %p242, %s241, 7
        %s244 = smul.addr %s243, 8
        %s245 = scalar_lea.vmem %s2, %s244
        %s246 = smul.u32 4, %s22
        %s247 = smul.u32 4, %s22
        %s248 = smul.u32 4, %s22
        %p249 = scmp.lt.s32.totalorder %s248, 7
        %s250 = scalar_select %p249, %s248, 7
        %s251 = smul.addr %s250, 8
        %s252 = scalar_lea.vmem %s4, %s251
        %s253 = smul.u32 4, %s22
        %v255 = vld [vmem:[%s205] sm:$0xff]
        %v256 = vld [vmem:[%s205 + $0x8] sm:$0xff]
        %v257 = vld [vmem:[%s205 + $0x10] sm:$0xff]
        %v258 = vld [vmem:[%s205 + $0x18] sm:$0xff]
        %v259 = vld [vmem:[%s245] sm:$0xff]
        %v260 = vld [vmem:[%s245 + $0x8] sm:$0xff]
        %v261 = vld [vmem:[%s245 + $0x10] sm:$0xff]
        %v262 = vld [vmem:[%s245 + $0x18] sm:$0xff]
        %v263 = vmul.f32 %v259, 1.4354441
        %v264 = vmul.f32 %v260, 1.4354441
        %v265 = vmul.f32 %v261, 1.4354441
        %v266 = vmul.f32 %v262, 1.4354441
        %v267 = vadd.f32 %v263, 1000.0
        %v268 = vadd.f32 %v264, 1000.0
        %v269 = vadd.f32 %v265, 1000.0
        %v270 = vadd.f32 %v266, 1000.0
        %271 = vmax.xlane.f32.xlu0 %v255
        %v272 = vpop.xlane.xlu0 %271
        %273 = vmax.xlane.f32.xlu0 %v256
        %v274 = vpop.xlane.xlu0 %273
        %275 = vmax.xlane.f32.xlu0 %v257
        %v276 = vpop.xlane.xlu0 %275
        %277 = vmax.xlane.f32.xlu0 %v258
        %v278 = vpop.xlane.xlu0 %277
        %v279 = vsub.f32 %v255, %v272
        %v280 = vsub.f32 %v256, %v274
        %v281 = vsub.f32 %v257, %v276
        %v282 = vsub.f32 %v258, %v278
        %v283 = vmul.f32 %v279, 1.442695
        %v284 = vpow.pop %v283
        %v285 = vmul.f32 %v280, 1.442695
        %v286 = vpow.pop %v285
        %v287 = vmul.f32 %v281, 1.442695
        %v288 = vpow.pop %v287
        %v289 = vmul.f32 %v282, 1.442695
        %v290 = vpow.pop %v289
        %291 = vadd.xlane.f32.xlu0 %v284
        %v292 = vpop.xlane.xlu0 %291
        %293 = vadd.xlane.f32.xlu0 %v286
        %v294 = vpop.xlane.xlu0 %293
        %295 = vadd.xlane.f32.xlu0 %v288
        %v296 = vpop.xlane.xlu0 %295
        %297 = vadd.xlane.f32.xlu0 %v290
        %v298 = vpop.xlane.xlu0 %297
        %v299 = vlog2.pop %v292
        %v300 = vmul.f32 %v299, 0.6931472
        %v301 = vlog2.pop %v294
        %v302 = vmul.f32 %v301, 0.6931472
        %v303 = vlog2.pop %v296
        %v304 = vmul.f32 %v303, 0.6931472
        %v305 = vlog2.pop %v298
        %v306 = vmul.f32 %v305, 0.6931472
        %v307 = vadd.f32 %v272, %v300
        %v308 = vadd.f32 %v274, %v302
        %v309 = vadd.f32 %v276, %v304
        %v310 = vadd.f32 %v278, %v306
        %v311 = vsub.f32 %v255, %v307
        %v312 = vsub.f32 %v256, %v308
        %v313 = vsub.f32 %v257, %v309
        %v314 = vsub.f32 %v258, %v310
        %v315 = vmul.f32 %v311, 0.02
        %v316 = vmul.f32 %v312, 0.02
        %v317 = vmul.f32 %v313, 0.02
        %v318 = vmul.f32 %v314, 0.02
        %v319 = vmul.f32 %v315, 1.442695
        %v320 = vpow.pop %v319
        %v321 = vmul.f32 %v316, 1.442695
        %v322 = vpow.pop %v321
        %v323 = vmul.f32 %v317, 1.442695
        %v324 = vpow.pop %v323
        %v325 = vmul.f32 %v318, 1.442695
        %v326 = vpow.pop %v325
        %v327 = vpack.c.bf16 %v322, %v320
        %v328 = vpack.c.bf16 %v326, %v324
        %v329 = vsub.f32 %v307, 90.63462
        %v330 = vsub.f32 %v308, 90.63462
        %v331 = vsub.f32 %v309, 90.63462
        %v332 = vsub.f32 %v310, 90.63462
        %v333 = vadd.f32 %v329, %v267
        %v334 = vadd.f32 %v330, %v268
        %v335 = vadd.f32 %v331, %v269
        %v336 = vadd.f32 %v332, %v270
        %v337 = vlog2.pop %v259
        %v338 = vmul.f32 %v337, 0.6931472
        %v339 = vlog2.pop %v260
        %v340 = vmul.f32 %v339, 0.6931472
        %v341 = vlog2.pop %v261
        %v342 = vmul.f32 %v341, 0.6931472
        %v343 = vlog2.pop %v262
        %v344 = vmul.f32 %v343, 0.6931472
        %v345 = vadd.f32 %v333, -6.9077554
        %v346 = vadd.f32 %v334, -6.9077554
        %v347 = vadd.f32 %v335, -6.9077554
        %v348 = vadd.f32 %v336, -6.9077554
        %353 = vrot.lane.b32.xlu0 %v345, 1
        %v354 = vpop.permute.xlu0 %353
        %355 = vrot.lane.b32.xlu0 %v346, 1
        %v356 = vpop.permute.xlu0 %355
        %357 = vrot.lane.b32.xlu0 %v347, 1
        %v358 = vpop.permute.xlu0 %357
        %359 = vrot.lane.b32.xlu0 %v348, 1
        %v360 = vpop.permute.xlu0 %359
        %vm365 = vcmp.lt.f32.partialorder %v338, %v354
        %vm366 = vcmp.lt.f32.partialorder %v340, %v356
        %vm367 = vcmp.lt.f32.partialorder %v342, %v358
        %vm368 = vcmp.lt.f32.partialorder %v344, %v360
        %v369 = vld [vmem:[%s0] sm:$0xf]
        %v370 = vld [vmem:[%s0 + $0x4] sm:$0xf]
        %v371 = vld [vmem:[%s0 + $0x8] sm:$0xf]
        %v372 = vld [vmem:[%s0 + $0xc] sm:$0xf]
        %v373 = vld [vmem:[%s0 + $0x10] sm:$0xf]
        %v374 = vld [vmem:[%s0 + $0x14] sm:$0xf]
        %v375 = vld [vmem:[%s0 + $0x18] sm:$0xf]
        %v376 = vld [vmem:[%s0 + $0x1c] sm:$0xf]
        %v377 = vld [vmem:[%s0 + $0x20] sm:$0xf]
        %v378 = vld [vmem:[%s0 + $0x24] sm:$0xf]
        %v379 = vld [vmem:[%s0 + $0x28] sm:$0xf]
        %v380 = vld [vmem:[%s0 + $0x2c] sm:$0xf]
        %v381 = vld [vmem:[%s0 + $0x30] sm:$0xf]
        %v382 = vld [vmem:[%s0 + $0x34] sm:$0xf]
        %v383 = vld [vmem:[%s0 + $0x38] sm:$0xf]
        %v384 = vld [vmem:[%s0 + $0x3c] sm:$0xf]
        %v401 = vunpack.c.l.b16 %v369
        %v402 = vunpack.c.l.b16 %v370
        %v403 = vunpack.c.l.b16 %v371
        %v404 = vunpack.c.l.b16 %v372
        %v405 = vunpack.c.l.b16 %v373
        %v406 = vunpack.c.l.b16 %v374
        %v407 = vunpack.c.l.b16 %v375
        %v408 = vunpack.c.l.b16 %v376
        %v409 = vunpack.c.l.b16 %v377
        %v410 = vunpack.c.l.b16 %v378
        %v411 = vunpack.c.l.b16 %v379
        %v412 = vunpack.c.l.b16 %v380
        %v413 = vunpack.c.l.b16 %v381
        %v414 = vunpack.c.l.b16 %v382
        %v415 = vunpack.c.l.b16 %v383
        %v416 = vunpack.c.l.b16 %v384
        %v417 = vpack.c.b16 %v402, %v401
        %v418 = vpack.c.b16 %v404, %v403
        %v419 = vpack.c.b16 %v406, %v405
        %v420 = vpack.c.b16 %v408, %v407
        %v421 = vpack.c.b16 %v410, %v409
        %v422 = vpack.c.b16 %v412, %v411
        %v423 = vpack.c.b16 %v414, %v413
        %v424 = vpack.c.b16 %v416, %v415
        %433 = vmatprep.subr.bf16.mxu0 0
        %434 = vmatpush1.bf16.msra.mxu0 %v417
        %435 = vmatprep.subr.bf16.mxu0 0
        %436 = vmatpush1.bf16.msra.mxu0 %v418
        %437 = vmatprep.subr.bf16.mxu0 0
        %438 = vmatpush1.bf16.msra.mxu0 %v419
        %439 = vmatprep.subr.bf16.mxu0 0
        %440 = vmatpush1.bf16.msra.mxu0 %v420
        %441 = vmatprep.subr.bf16.mxu0 0
        %442 = vmatpush1.bf16.msra.mxu0 %v421
        %443 = vmatprep.subr.bf16.mxu0 0
        %444 = vmatpush1.bf16.msra.mxu0 %v422
        %445 = vmatprep.subr.bf16.mxu0 0
        %446 = vmatpush1.bf16.msra.mxu0 %v423
        %447 = vmatprep.subr.bf16.mxu0 0
        %448 = vmatpush1.bf16.msra.mxu0 %v424
        %449 = vmatprep.subr.bf16.mxu0 0
        %450 = vmatpush1.bf16.msra.mxu0 0
        %451 = vmatprep.subr.bf16.mxu0 0
        %452 = vmatpush1.bf16.msra.mxu0 0
        %453 = vmatprep.subr.bf16.mxu0 0
        %454 = vmatpush1.bf16.msra.mxu0 0
        %455 = vmatprep.subr.bf16.mxu0 0
        %456 = vmatpush1.bf16.msra.mxu0 0
        %457 = vmatprep.subr.bf16.mxu0 0
        %458 = vmatpush1.bf16.msra.mxu0 0
        %459 = vmatprep.subr.bf16.mxu0 0
        %460 = vmatpush1.bf16.msra.mxu0 0
        %461 = vmatprep.subr.bf16.mxu0 0
        %462 = vmatpush1.bf16.msra.mxu0 0
        %463 = vmatprep.subr.bf16.mxu0 0
        %464 = vmatpush1.bf16.msra.mxu0 0
        %465 = vmatprep.mubr.bf16.mxu0 0
        %466 = vmatmul.mubr.bf16.gmra.mrb[0].mxu0 %v327
        %v467 = vpop.f32.mrb[0].mxu0
        %v468 = vadd.f32 0.0, %v467
        %v469 = vpop.f32.mrb[0].mxu0
        %v470 = vpop.f32.mrb[0].mxu0
        %v471 = vadd.f32 0.0, %v470
        %v472 = vpop.f32.mrb[0].mxu0
        %473 = vmatprep.mubr.bf16.mxu0 0
        %474 = vmatmul.mubr.bf16.gmra.mrb[0].mxu0 %v328
        %v475 = vpop.f32.mrb[0].mxu0
        %v476 = vadd.f32 0.0, %v475
        %v477 = vpop.f32.mrb[0].mxu0
        %v478 = vpop.f32.mrb[0].mxu0
        %v479 = vadd.f32 0.0, %v478
        %v480 = vpop.f32.mrb[0].mxu0
        %481 = vdwg.mxu0
        %483 = vset.pattern.permute.xlu0 2
        %484 = vperm.xlu0 %483, %v259
        %v485 = vpop.permute.xlu0 %484
        %488 = vset.pattern.permute.xlu0 2
        %489 = vperm.xlu0 %488, %v260
        %v490 = vpop.permute.xlu0 %489
        %493 = vset.pattern.permute.xlu0 2
        %494 = vperm.xlu0 %493, %v261
        %v495 = vpop.permute.xlu0 %494
        %498 = vset.pattern.permute.xlu0 2
        %499 = vperm.xlu0 %498, %v262
        %v500 = vpop.permute.xlu0 %499
        %vm502 = vcmp.lt.f32.partialorder %v468, %v485
        %vm503 = vcmp.lt.f32.partialorder %v471, %v490
        %vm504 = vcmp.lt.f32.partialorder %v476, %v495
        %vm505 = vcmp.lt.f32.partialorder %v479, %v500
        %v506 = vsel %vm502, 1, 0
        %v507 = vsel %vm503, 1, 0
        %v508 = vsel %vm504, 1, 0
        %v509 = vsel %vm505, 1, 0
        %v510 = vand.u32 %v506, 65535
        %v511 = vshrl.u32 %v506, 16
        %v512 = vcvt.s32.f32 %v510
        %v513 = vcvt.s32.f32 %v511
        %514 = vadd.xlane.f32.xlu0 %v512
        %v515 = vpop.xlane.xlu0 %514
        %516 = vadd.xlane.f32.xlu0 %v513
        %v517 = vpop.xlane.xlu0 %516
        %v518 = vcvt.f32.s32 %v515
        %v519 = vcvt.f32.s32 %v517
        %v520 = vshll.u32 %v519, 16
        %v521 = vadd.s32 %v520, %v518
        %v522 = vand.u32 %v507, 65535
        %v523 = vshrl.u32 %v507, 16
        %v524 = vcvt.s32.f32 %v522
        %v525 = vcvt.s32.f32 %v523
        %526 = vadd.xlane.f32.xlu0 %v524
        %v527 = vpop.xlane.xlu0 %526
        %528 = vadd.xlane.f32.xlu0 %v525
        %v529 = vpop.xlane.xlu0 %528
        %v530 = vcvt.f32.s32 %v527
        %v531 = vcvt.f32.s32 %v529
        %v532 = vshll.u32 %v531, 16
        %v533 = vadd.s32 %v532, %v530
        %v534 = vand.u32 %v508, 65535
        %v535 = vshrl.u32 %v508, 16
        %v536 = vcvt.s32.f32 %v534
        %v537 = vcvt.s32.f32 %v535
        %538 = vadd.xlane.f32.xlu0 %v536
        %v539 = vpop.xlane.xlu0 %538
        %540 = vadd.xlane.f32.xlu0 %v537
        %v541 = vpop.xlane.xlu0 %540
        %v542 = vcvt.f32.s32 %v539
        %v543 = vcvt.f32.s32 %v541
        %v544 = vshll.u32 %v543, 16
        %v545 = vadd.s32 %v544, %v542
        %v546 = vand.u32 %v509, 65535
        %v547 = vshrl.u32 %v509, 16
        %v548 = vcvt.s32.f32 %v546
        %v549 = vcvt.s32.f32 %v547
        %550 = vadd.xlane.f32.xlu0 %v548
        %v551 = vpop.xlane.xlu0 %550
        %552 = vadd.xlane.f32.xlu0 %v549
        %v553 = vpop.xlane.xlu0 %552
        %v554 = vcvt.f32.s32 %v551
        %v555 = vcvt.f32.s32 %v553
        %v556 = vshll.u32 %v555, 16
        %v557 = vadd.s32 %v556, %v554
        %vm558 = vcmp.eq.s32.totalorder %v521, 128
        %vm559 = vcmp.eq.s32.totalorder %v533, 128
        %vm560 = vcmp.eq.s32.totalorder %v545, 128
        %vm561 = vcmp.eq.s32.totalorder %v557, 128
        %v562 = vsel %vm558, 0, %v521
        %v563 = vsel %vm559, 0, %v533
        %v564 = vsel %vm560, 0, %v545
        %v565 = vsel %vm561, 0, %v557
        %v566 = vlaneseq
        %v567 = vand.u32 %v566, 127
        %vm568 = vcmp.eq.s32.totalorder %v567, %v562
        %vm569 = vcmp.eq.s32.totalorder %v567, %v563
        %vm570 = vcmp.eq.s32.totalorder %v567, %v564
        %vm571 = vcmp.eq.s32.totalorder %v567, %v565
        %v572 = vsel %vm365, 1, 0
        %v573 = vsel %vm366, 1, 0
        %v574 = vsel %vm367, 1, 0
        %v575 = vsel %vm368, 1, 0
        %576 = vset.pattern.permute.xlu0 1
        %577 = vperm.xlu0 %576, %v572
        %v578 = vpop.permute.xlu0 %577
        %579 = vset.pattern.permute.xlu0 1
        %580 = vperm.xlu0 %579, %v573
        %v581 = vpop.permute.xlu0 %580
        %582 = vset.pattern.permute.xlu0 1
        %583 = vperm.xlu0 %582, %v574
        %v584 = vpop.permute.xlu0 %583
        %585 = vset.pattern.permute.xlu0 1
        %586 = vperm.xlu0 %585, %v575
        %v587 = vpop.permute.xlu0 %586
        %vm588 = vcmp.eq.s32.totalorder %v578, 1
        %vm589 = vcmp.eq.s32.totalorder %v581, 1
        %vm590 = vcmp.eq.s32.totalorder %v584, 1
        %vm591 = vcmp.eq.s32.totalorder %v587, 1
        %vm592 = vmand %vm568, %vm588
        %vm593 = vmand %vm569, %vm589
        %vm594 = vmand %vm570, %vm590
        %vm595 = vmand %vm571, %vm591
        %v596 = vsel %vm592, 1, 0
        %v597 = vsel %vm593, 1, 0
        %v598 = vsel %vm594, 1, 0
        %v599 = vsel %vm595, 1, 0
        %v600 = vcvt.s32.f32 %v596
        %v601 = vcvt.s32.f32 %v597
        %v602 = vcvt.s32.f32 %v598
        %v603 = vcvt.s32.f32 %v599
        %604 = vst [vmem:[%s232] sm:$0xff] %v600
        %605 = vst [vmem:[%s232 + $0x8] sm:$0xff] %v601
        %606 = vst [vmem:[%s232 + $0x10] sm:$0xff] %v602
        %607 = vst [vmem:[%s232 + $0x18] sm:$0xff] %v603
        %v608 = vcvt.s32.f32 %v572
        %v609 = vcvt.s32.f32 %v573
        %v610 = vcvt.s32.f32 %v574
        %v611 = vcvt.s32.f32 %v575
        %v612 = vmul.f32 %v608, 3000.0
        %v613 = vmul.f32 %v609, 3000.0
        %v614 = vmul.f32 %v610, 3000.0
        %v615 = vmul.f32 %v611, 3000.0
        %v616 = vadd.f32 %v612, 164.83997
        %v617 = vadd.f32 %v613, 164.83997
        %v618 = vadd.f32 %v614, 164.83997
        %v619 = vadd.f32 %v615, 164.83997
        %v620 = vsub.f32 %v267, 1000.0
        %v621 = vsub.f32 %v268, 1000.0
        %v622 = vsub.f32 %v269, 1000.0
        %v623 = vsub.f32 %v270, 1000.0
        %v624 = vmul.f32 %v620, 0.8187308
        %v625 = vmul.f32 %v621, 0.8187308
        %v626 = vmul.f32 %v622, 0.8187308
        %v627 = vmul.f32 %v623, 0.8187308
        %v628 = vadd.f32 %v624, 1000.0
        %v629 = vadd.f32 %v625, 1000.0
        %v630 = vadd.f32 %v626, 1000.0
        %v631 = vadd.f32 %v627, 1000.0
        %636 = vrot.lane.b32.xlu0 %v263, 125
        %v637 = vpop.permute.xlu0 %636
        %638 = vrot.lane.b32.xlu0 %v264, 125
        %v639 = vpop.permute.xlu0 %638
        %640 = vrot.lane.b32.xlu0 %v265, 125
        %v641 = vpop.permute.xlu0 %640
        %642 = vrot.lane.b32.xlu0 %v266, 125
        %v643 = vpop.permute.xlu0 %642
        %v648 = vadd.f32 %v628, %v637
        %v649 = vadd.f32 %v629, %v639
        %v650 = vadd.f32 %v630, %v641
        %v651 = vadd.f32 %v631, %v643
        %vm652 = vcmp.eq.s32.totalorder %v567, 0
        %v653 = vsel %vm652, 1, 0
        %vm654 = vcmp.eq.s32.totalorder %v653, 1
        %656 = vset.pattern.permute.xlu0 1
        %657 = vperm.xlu0 %656, %v616
        %v658 = vpop.permute.xlu0 %657
        %661 = vset.pattern.permute.xlu0 1
        %662 = vperm.xlu0 %661, %v617
        %v663 = vpop.permute.xlu0 %662
        %666 = vset.pattern.permute.xlu0 1
        %667 = vperm.xlu0 %666, %v618
        %v668 = vpop.permute.xlu0 %667
        %671 = vset.pattern.permute.xlu0 1
        %672 = vperm.xlu0 %671, %v619
        %v673 = vpop.permute.xlu0 %672
        %676 = vset.pattern.permute.xlu0 0
        %677 = vperm.xlu0 %676, %v648
        %v678 = vpop.permute.xlu0 %677
        %681 = vset.pattern.permute.xlu0 0
        %682 = vperm.xlu0 %681, %v649
        %v683 = vpop.permute.xlu0 %682
        %686 = vset.pattern.permute.xlu0 0
        %687 = vperm.xlu0 %686, %v650
        %v688 = vpop.permute.xlu0 %687
        %691 = vset.pattern.permute.xlu0 0
        %692 = vperm.xlu0 %691, %v651
        %v693 = vpop.permute.xlu0 %692
        %v695 = vsel %vm654, %v658, %v678
        %v696 = vsel %vm654, %v663, %v683
        %v697 = vsel %vm654, %v668, %v688
        %v698 = vsel %vm654, %v673, %v693
        %vm699 = vcmask 15360
        %700 = vst.msk [vmem:[%s252] sm:$0xff] %vm699, %v695
        %701 = vst.msk [vmem:[%s252 + $0x8] sm:$0xff] %vm699, %v696
        %702 = vst.msk [vmem:[%s252 + $0x10] sm:$0xff] %vm699, %v697
        %703 = vst.msk [vmem:[%s252 + $0x18] sm:$0xff] %vm699, %v698
        %s704 = sand.u32 %s103, 1
        %s705 = scalar_lea.sflag [#allocation4], %s704
        %s706 = sand.u32 %s103, 1
        %s707 = smul.addr %s706, 32
        %s708 = scalar_lea.vmem [#allocation5], %s707
        %s709 = smul.u32 4, %s22
        %p710 = scmp.lt.s32.totalorder %s709, 7
        %s711 = scalar_select %p710, %s709, 7
        %s712 = smul.addr %s711, 8
        %s713 = scalar_lea.vmem %s4, %s712
        // Predicated region
        $region37: #{tpu_custom_call.1} parent=31 // pred_check
          %p714 = pneg %p113
        $region38: #{tpu_custom_call.1} parent=31 // pred_check_branch
          %716 = sbr.rel (%p714) target = $region40
        $region39: #{tpu_custom_call.1} parent=31 // pred_region
          %s717 = smul.u32 4, %s22
          %s719 = ssub.s32 512, 512
          %720 = vsyncadd %s705, %s719
          %s721 = smul.addr %s717, 128
          %s722 = scalar_lea.hbm %s3, %s721
          %s723 = sshll.u32 %s708, 4
          %s724 = int_to_ptr.vmem [resolvable:$true] %s723
          %729 = dma.vmem_to_hbm [thread:$0]  %s724, 512, %s722, %s705, 128, 128, 8
        $region40: #{tpu_custom_call.1} parent=31 // pred_fallthru
          _
        // Predicated region
        $region41: #{tpu_custom_call.1} parent=31 // pred_check
          %p730 = pneg %p139
        $region42: #{tpu_custom_call.1} parent=31 // pred_check_branch
          %732 = sbr.rel (%p730) target = $region44
        $region43: #{tpu_custom_call.1} parent=31 // pred_region
          %s733 = smul.u32 4, %s22
        $region44: #{tpu_custom_call.1} parent=31 // pred_fallthru
          _
      $region32: #{tpu_custom_call.1} parent=5 // pred_fallthru
        _
      %p734 = scmp.le.s32.totalorder 2, %s17
      // Predicated region
      $region45: #{tpu_custom_call.1} parent=5 // pred_check
        %p735 = pneg %p734
      $region46: #{tpu_custom_call.1} parent=5 // pred_check_branch
        %737 = sbr.rel (%p735) target = $region48
      $region47: #{tpu_custom_call.1} parent=5 // pred_region
        %s738 = ssub.s32 %s17, 2
        // Predicated region
        $region49: #{tpu_custom_call.1} parent=47 // pred_check
          %p739 = pneg %p119
        $region50: #{tpu_custom_call.1} parent=47 // pred_check_branch
          %741 = sbr.rel (%p739) target = $region52
        $region51: #{tpu_custom_call.1} parent=47 // pred_region
          %s742 = sand.u32 %s104, 1
          %s743 = scalar_lea.sflag [#allocation4], %s742
          %s744 = sand.u32 %s104, 1
          %s745 = smul.addr %s744, 32
          %s746 = scalar_lea.vmem [#allocation5], %s745
          %747 = dma.done %s743, 512
        $region52: #{tpu_custom_call.1} parent=47 // pred_fallthru
          _
        // Predicated region
        $region53: #{tpu_custom_call.1} parent=47 // pred_check
          %p748 = pneg %p145
        $region54: #{tpu_custom_call.1} parent=47 // pred_check_branch
          %750 = sbr.rel (%p748) target = $region56
        $region55: #{tpu_custom_call.1} parent=47 // pred_region
          %s751 = smul.u32 4, %s23
          %p752 = scmp.lt.s32.totalorder %s751, 7
          %s753 = scalar_select %p752, %s751, 7
          %s754 = smul.addr %s753, 8
          %s755 = scalar_lea.vmem %s4, %s754
        $region56: #{tpu_custom_call.1} parent=47 // pred_fallthru
          _
      $region48: #{tpu_custom_call.1} parent=5 // pred_fallthru
        _
    $region6: #{tpu_custom_call.1} parent=1 // loop_footer
      %s21 = sadd.s32 1, %s17
    $region7: #{tpu_custom_call.1} parent=1 // loop_footer_branch
      %16 = sbr.rel target = $region3
    $region8: #{tpu_custom_call.1} parent=1 // loop_exit
      _
    %756 = vsyncpa [#allocation3], 1
    %s757 = scalar_lea.sflag [#allocation3], 1
    %758 = vsyncpa %s757, 1
    %759 = vsyncpa [#allocation4], 1
    %s760 = scalar_lea.sflag [#allocation4], 1
    %761 = vsyncpa %s760, 1

</llo_original>
